<compile_context>
chip_gen: v7x
topology: tpu7x:2x2x1
jax: 0.10.0
libtpu: 0.0.40
codegen_flags: <defaults>
</compile_context>

<pallas_src>
from typing import NamedTuple

import jax
import jax.numpy as jnp
from jax.experimental import pallas as pl
from jax.experimental.pallas import tpu as pltpu

_LANE = 128
_BF16_SUBLANES = 16


def _round_up(x, m):
    return ((x + m - 1) // m) * m


def _vmem_capacity_bytes():
    """Device VMEM capacity; conservative 64 MiB (v7x per-TC) fallback."""
    try:
        cap = int(getattr(pltpu.get_tpu_info(), "vmem_capacity_bytes"))
        if cap > 0:
            return cap
    except Exception:
        pass
    return 64 << 20


def _vmem_estimate(row_tile, k_tile, inner_p, head_p, cbytes):
    """Conservative VMEM footprint (default double-buffering on every block)."""
    return (2 * row_tile * k_tile * cbytes        # x tile
            + 2 * k_tile * inner_p * cbytes       # w6 tile
            + 2 * inner_p * inner_p * cbytes      # w7 (constant block)
            + 2 * inner_p * head_p * cbytes       # [wc | wb]
            + 2 * (2 * inner_p + head_p) * 4      # biases (f32)
            + 2 * row_tile * head_p * 4           # fused output tile
            + row_tile * inner_p * 4)             # fc6 accumulator scratch


def _choose_k_tiling(d_in, row_tile, inner_p, head_p, cbytes, vmem_budget):
    """Pick the largest k tile that fits VMEM; prefer full w6 residency."""
    d_in_p = _round_up(d_in, _LANE)
    fixed = _vmem_estimate(row_tile, 0, inner_p, head_p, cbytes)
    per_k = 2 * (row_tile + inner_p) * cbytes       # x + w6, double-buffered
    k_fit = max((vmem_budget - fixed) // per_k, _LANE)
    k_fit = max((k_fit // _LANE) * _LANE, _LANE)
    if k_fit >= d_in_p:
        k_tile = d_in_p                              # w6 DMA'd once per kernel
    else:
        n_steps = -(-d_in_p // k_fit)                # minimal #k steps that fit
        k_tile = _round_up(-(-d_in_p // n_steps), _LANE)
    d_in_k = _round_up(d_in_p, k_tile)               # zero-pad reduction dim
    return d_in_k, k_tile


def _choose_row_tile(n, row_tile_cap):
    n16 = _round_up(max(n, 1), _BF16_SUBLANES)       # packed bf16 sublane tile
    row_tile = min(row_tile_cap, n16)
    # Guarantee >=2 row tiles for moderately large batches so a 2-TC chip
    # (v7x) can shard the "parallel" row axis across both cores.
    if row_tile >= 256 and _round_up(n16, row_tile) // row_tile < 2:
        row_tile = _round_up(-(-n16 // 2), _BF16_SUBLANES)
    n_p = _round_up(n16, row_tile)
    return row_tile, n_p


# --------------------------------------------------------------------------
# Kernel
# --------------------------------------------------------------------------
def _box_head_kernel(x_ref, w6_ref, b6_ref, w7_ref, b7_ref, wh_ref, bh_ref,
                     out_ref, acc_ref):
    """Grid = (row tiles, k tiles over the fc6 reduction dim).

    fc6 partial products accumulate in a f32 VMEM scratch; fc7 and the fused
    [cls | bbox] head run once per row tile on the last k step.
    """
    k = pl.program_id(1)

    partial = jnp.dot(x_ref[...], w6_ref[...],
                      preferred_element_type=jnp.float32)

    @pl.when(k == 0)
    def _():
        acc_ref[...] = partial            # direct write: no zero-fill pass

    @pl.when(k > 0)
    def _():
        acc_ref[...] += partial

    @pl.when(k == pl.num_programs(1) - 1)
    def _():
        h = jnp.maximum(acc_ref[...] + b6_ref[...], 0.0)               # fc6 + ReLU
        h = jnp.dot(h.astype(w7_ref.dtype), w7_ref[...],
                    preferred_element_type=jnp.float32) + b7_ref[...]
        h = jnp.maximum(h, 0.0)                                        # fc7 + ReLU
        out = jnp.dot(h.astype(wh_ref.dtype), wh_ref[...],
                      preferred_element_type=jnp.float32) + bh_ref[...]
        out_ref[...] = out.astype(out_ref.dtype)                       # [cls | bbox | pad]


# --------------------------------------------------------------------------
# Wrapper
# --------------------------------------------------------------------------
class _BoxHeadGeom(NamedTuple):
    d_in: int
    d_in_k: int
    k_tile: int
    inner_p: int
    head_p: int
    n_cls_out: int
    row_tile_cap: int
    vmem_capacity: int
    compute_dtype: object


def prepare_box_head_params(params, *, row_tile_cap=512,
                            compute_dtype=jnp.bfloat16):
    """Pad / cast the weights ONCE. Returns (weights_tuple, geometry)."""
    w6, b6, w7, b7, wc, bc, wb, bb = params
    d_in, inner = w6.shape
    n_cls_out = wc.shape[1]                      # num_cls + 1
    n_head = n_cls_out + 4                       # fused [cls | bbox] width
    inner_p = _round_up(inner, _LANE)
    head_p = _round_up(n_head, _LANE)            # lane-dense fused output width
    cbytes = jnp.dtype(compute_dtype).itemsize

    capacity = _vmem_capacity_bytes()
    budget = max(capacity - (16 << 20), 32 << 20)
    d_in_k, k_tile = _choose_k_tiling(d_in, row_tile_cap, inner_p, head_p,
                                      cbytes, budget)

    def pad2(a, rows, cols):
        a = jnp.asarray(a, jnp.float32)
        return jnp.pad(a, ((0, rows - a.shape[0]), (0, cols - a.shape[1])))

    weights = (
        pad2(w6, d_in_k, inner_p).astype(compute_dtype),                      # w6
        pad2(jnp.reshape(b6, (1, -1)), 1, inner_p),                           # b6 (f32)
        pad2(w7, inner_p, inner_p).astype(compute_dtype),                     # w7
        pad2(jnp.reshape(b7, (1, -1)), 1, inner_p),                           # b7 (f32)
        pad2(jnp.concatenate([wc, wb], axis=1), inner_p, head_p
             ).astype(compute_dtype),                                         # [wc | wb]
        pad2(jnp.concatenate([jnp.reshape(bc, (1, -1)),
                              jnp.reshape(bb, (1, -1))], axis=1), 1, head_p), # [bc | bb]
    )
    geom = _BoxHeadGeom(d_in=int(d_in), d_in_k=int(d_in_k), k_tile=int(k_tile),
                        inner_p=int(inner_p), head_p=int(head_p),
                        n_cls_out=int(n_cls_out), row_tile_cap=int(row_tile_cap),
                        vmem_capacity=int(capacity), compute_dtype=compute_dtype)
    return weights, geom


def box_head_forward(x_nchw, weights, geom):
    """x_nchw: (N, C, H, W). Returns (scores, bbox_deltas)."""
    w6_p, b6_p, w7_p, b7_p, wh_p, bh_p = weights
    n = x_nchw.shape[0]
    x = x_nchw.reshape(n, -1)                    # == torch flatten(start_dim=1)
    if x.shape[1] != geom.d_in:
        raise ValueError(f"expected {geom.d_in} features, got {x.shape[1]}")

    row_tile, n_p = _choose_row_tile(n, geom.row_tile_cap)
    cbytes = jnp.dtype(geom.compute_dtype).itemsize

    x_p = jnp.pad(x, ((0, n_p - n), (0, geom.d_in_k - geom.d_in))
                  ).astype(geom.compute_dtype)

    grid = (n_p // row_tile, geom.d_in_k // geom.k_tile)

    vmem_need = _vmem_estimate(row_tile, geom.k_tile, geom.inner_p, geom.head_p,
                               cbytes)
    vmem_limit = int(min(max(vmem_need + (8 << 20), 32 << 20),
                         geom.vmem_capacity - (2 << 20)))

    cost = pl.CostEstimate(
        flops=2 * n_p * (geom.d_in_k * geom.inner_p
                         + geom.inner_p * geom.inner_p
                         + geom.inner_p * geom.head_p),
        transcendentals=0,
        bytes_accessed=(x_p.size * cbytes
                        + (w6_p.size + w7_p.size + wh_p.size) * cbytes
                        + (b6_p.size + b7_p.size + bh_p.size) * 4
                        + n_p * geom.head_p * 4),
    )

    kernel = pl.pallas_call(
        _box_head_kernel,
        out_shape=jax.ShapeDtypeStruct((n_p, geom.head_p), jnp.float32),
        grid_spec=pltpu.PrefetchScalarGridSpec(
            num_scalar_prefetch=0,
            grid=grid,
            in_specs=[
                pl.BlockSpec((row_tile, geom.k_tile), lambda i, k: (i, k)),       # x
                pl.BlockSpec((geom.k_tile, geom.inner_p), lambda i, k: (k, 0)),   # w6
                pl.BlockSpec((1, geom.inner_p), lambda i, k: (0, 0)),             # b6
                pl.BlockSpec((geom.inner_p, geom.inner_p), lambda i, k: (0, 0)),  # w7
                pl.BlockSpec((1, geom.inner_p), lambda i, k: (0, 0)),             # b7
                pl.BlockSpec((geom.inner_p, geom.head_p), lambda i, k: (0, 0)),   # [wc|wb]
                pl.BlockSpec((1, geom.head_p), lambda i, k: (0, 0)),              # [bc|bb]
            ],
            out_specs=pl.BlockSpec((row_tile, geom.head_p), lambda i, k: (i, 0)),
            scratch_shapes=[pltpu.VMEM((row_tile, geom.inner_p), jnp.float32)],
        ),
        compiler_params=pltpu.CompilerParams(
            dimension_semantics=("parallel", "arbitrary"),
            vmem_limit_bytes=vmem_limit,
        ),
        cost_estimate=cost,
    )
    out = kernel(x_p, w6_p, b6_p, w7_p, b7_p, wh_p, bh_p)
    scores = out[:n, :geom.n_cls_out]
    bbox_deltas = out[:n, geom.n_cls_out:geom.n_cls_out + 4]
    return scores, bbox_deltas


def make_box_head_fn(params, *, row_tile_cap=512, compute_dtype=jnp.bfloat16):
    """Prepare (pad + bf16-cast) the weights once and return a jitted forward."""
    weights, geom = prepare_box_head_params(params, row_tile_cap=row_tile_cap,
                                            compute_dtype=compute_dtype)
    fwd = jax.jit(lambda x, w: box_head_forward(x, w, geom))
    return lambda x: fwd(x, weights)


# --------------------------------------------------------------------------
# Params / reference / test
# --------------------------------------------------------------------------
def init_params(key, in_channels, inner_channels, num_cls=1):
    """Synthetic params matching the module's __init__ shapes.

    Weights stored as (in, out); biases as (1, out). cls/bbox follow the
    module's init (normal 0.01 / 0.001, zero bias); fc6/fc7 use a small
    uniform init (stand-in for PyTorch's default Linear init).
    """
    k6, k7, kc, kb = jax.random.split(key, 4)
    lim6 = 1.0 / jnp.sqrt(in_channels)
    lim7 = 1.0 / jnp.sqrt(inner_channels)
    w6 = jax.random.uniform(k6, (in_channels, inner_channels), jnp.float32, -lim6, lim6)
    b6 = jnp.zeros((1, inner_channels), jnp.float32)
    w7 = jax.random.uniform(k7, (inner_channels, inner_channels), jnp.float32, -lim7, lim7)
    b7 = jnp.zeros((1, inner_channels), jnp.float32)
    wc = 0.01 * jax.random.normal(kc, (inner_channels, num_cls + 1), jnp.float32)
    bc = jnp.zeros((1, num_cls + 1), jnp.float32)
    wb = 0.001 * jax.random.normal(kb, (inner_channels, 4), jnp.float32)
    bb = jnp.zeros((1, 4), jnp.float32)
    return (w6, b6, w7, b7, wc, bc, wb, bb)


def _reference_forward(x_nchw, params, compute_dtype=jnp.bfloat16):
    """Pure-JAX reference using the same bf16-in / f32-accumulate math."""
    w6, b6, w7, b7, wc, bc, wb, bb = params
    x = x_nchw.reshape(x_nchw.shape[0], -1).astype(compute_dtype)
    h = jnp.dot(x, w6.astype(compute_dtype), preferred_element_type=jnp.float32) + b6
    h = jnp.maximum(h, 0.0)
    h = jnp.dot(h.astype(compute_dtype), w7.astype(compute_dtype),
                preferred_element_type=jnp.float32) + b7
    h = jnp.maximum(h, 0.0)
    hc = h.astype(compute_dtype)
    scores = jnp.dot(hc, wc.astype(compute_dtype),
                     preferred_element_type=jnp.float32) + bc
    bbox = jnp.dot(hc, wb.astype(compute_dtype),
                   preferred_element_type=jnp.float32) + bb
    return scores, bbox


if __name__ == "__main__":
    # Small shapes: 8 ROIs, 4 channels, 7x7 pooled features -> in_channels = 196.
    N, C, H, W = 8, 4, 7, 7
    in_channels = C * H * W
    inner_channels = 32
    num_cls = 1

    key = jax.random.PRNGKey(0)
    kx, kp = jax.random.split(key)
    x = jax.random.normal(kx, (N, C, H, W), jnp.float32)
    params = init_params(kp, in_channels, inner_channels, num_cls)

    box_head = make_box_head_fn(params)           # weights padded/cast once
    scores, bbox_deltas = box_head(x)
    scores = jax.block_until_ready(scores)
    bbox_deltas = jax.block_until_ready(bbox_deltas)

    ref_scores, ref_bbox = _reference_forward(x, params)
    assert scores.shape == (N, num_cls + 1)
    assert bbox_deltas.shape == (N, 4)
    assert jnp.allclose(scores, ref_scores, atol=1e-2, rtol=1e-2)
    assert jnp.allclose(bbox_deltas, ref_bbox, atol=1e-2, rtol=1e-2)

    print("KERNEL_OK")
</pallas_src>

<mosaic_0001>
module attributes {stable_mosaic.version = 11 : i64} {
  func.func @_box_head_kernel(%arg0: i32, %arg1: i32, %arg2: memref<16x256xbf16, #tpu.memory_space<vmem>>, %arg3: memref<256x128xbf16, #tpu.memory_space<vmem>>, %arg4: memref<1x128xf32, #tpu.memory_space<vmem>>, %arg5: memref<128x128xbf16, #tpu.memory_space<vmem>>, %arg6: memref<1x128xf32, #tpu.memory_space<vmem>>, %arg7: memref<128x128xbf16, #tpu.memory_space<vmem>>, %arg8: memref<1x128xf32, #tpu.memory_space<vmem>>, %arg9: memref<16x128xf32, #tpu.memory_space<vmem>>, %arg10: memref<16x128xf32, #tpu.memory_space<vmem>>) attributes {dimension_semantics = [#tpu.dimension_semantics<parallel>, #tpu.dimension_semantics<arbitrary>], iteration_bounds = array<i64: 1, 1>, scalar_prefetch = 0 : i64, scratch_operands = 1 : i64, tpu.core_type = #tpu.core_type<tc>, window_params = [{transform_indices = @transform_0, window_bounds = array<i64: 16, 256>}, {transform_indices = @transform_1, window_bounds = array<i64: 256, 128>}, {pipeline_mode = #tpu.pipeline_mode<synchronous>, transform_indices = @transform_2, window_bounds = array<i64: 1, 128>}, {pipeline_mode = #tpu.pipeline_mode<synchronous>, transform_indices = @transform_3, window_bounds = array<i64: 128, 128>}, {pipeline_mode = #tpu.pipeline_mode<synchronous>, transform_indices = @transform_4, window_bounds = array<i64: 1, 128>}, {pipeline_mode = #tpu.pipeline_mode<synchronous>, transform_indices = @transform_5, window_bounds = array<i64: 128, 128>}, {pipeline_mode = #tpu.pipeline_mode<synchronous>, transform_indices = @transform_6, window_bounds = array<i64: 1, 128>}, {transform_indices = @transform_7, window_bounds = array<i64: 16, 128>}]} {
    %c0 = arith.constant 0 : index
    %c0_0 = arith.constant 0 : index
    %0 = vector.load %arg2[%c0, %c0_0] : memref<16x256xbf16, #tpu.memory_space<vmem>>, vector<16x256xbf16>
    %c0_1 = arith.constant 0 : index
    %c0_2 = arith.constant 0 : index
    %1 = vector.load %arg3[%c0_1, %c0_2] : memref<256x128xbf16, #tpu.memory_space<vmem>>, vector<256x128xbf16>
    %cst = arith.constant dense<0.000000e+00> : vector<16x128xf32>
    %2 = tpu.matmul %0, %1, %cst {dimension_numbers = #tpu.dot_dimension_numbers<[1], [0], [0], [1], [0, 0, 1, 1], [], []>} : vector<16x256xbf16>, vector<256x128xbf16>, vector<16x128xf32> -> vector<16x128xf32>
    %c0_i32 = arith.constant 0 : i32
    %3 = arith.cmpi eq, %arg1, %c0_i32 : i32
    %4 = arith.extui %3 : i1 to i32
    %c0_i32_3 = arith.constant 0 : i32
    %5 = arith.cmpi ne, %4, %c0_i32_3 : i32
    scf.if %5 {
      %c0_8 = arith.constant 0 : index
      %c0_9 = arith.constant 0 : index
      %12 = vector.load %arg10[%c0_8, %c0_9] : memref<16x128xf32, #tpu.memory_space<vmem>>, vector<16x128xf32>
      tpu.vector_store %arg10[%c0_8, %c0_9], %2 {strides = array<i32>} : memref<16x128xf32, #tpu.memory_space<vmem>>, vector<16x128xf32>,
    } else {
    }
    %c0_i32_4 = arith.constant 0 : i32
    %6 = arith.cmpi sgt, %arg1, %c0_i32_4 : i32
    %7 = arith.extui %6 : i1 to i32
    %c0_i32_5 = arith.constant 0 : i32
    %8 = arith.cmpi ne, %7, %c0_i32_5 : i32
    scf.if %8 {
      %c0_8 = arith.constant 0 : index
      %c0_9 = arith.constant 0 : index
      %12 = vector.load %arg10[%c0_8, %c0_9] : memref<16x128xf32, #tpu.memory_space<vmem>>, vector<16x128xf32>
      %13 = arith.addf %12, %2 : vector<16x128xf32>
      %c0_10 = arith.constant 0 : index
      %c0_11 = arith.constant 0 : index
      %14 = vector.load %arg10[%c0_10, %c0_11] : memref<16x128xf32, #tpu.memory_space<vmem>>, vector<16x128xf32>
      tpu.vector_store %arg10[%c0_10, %c0_11], %13 {strides = array<i32>} : memref<16x128xf32, #tpu.memory_space<vmem>>, vector<16x128xf32>,
    } else {
    }
    %c0_i32_6 = arith.constant 0 : i32
    %9 = arith.cmpi eq, %arg1, %c0_i32_6 : i32
    %10 = arith.extui %9 : i1 to i32
    %c0_i32_7 = arith.constant 0 : i32
    %11 = arith.cmpi ne, %10, %c0_i32_7 : i32
    scf.if %11 {
      %c0_8 = arith.constant 0 : index
      %c0_9 = arith.constant 0 : index
      %12 = vector.load %arg10[%c0_8, %c0_9] : memref<16x128xf32, #tpu.memory_space<vmem>>, vector<16x128xf32>
      %c0_10 = arith.constant 0 : index
      %c0_11 = arith.constant 0 : index
      %13 = vector.load %arg4[%c0_10, %c0_11] : memref<1x128xf32, #tpu.memory_space<vmem>>, vector<1x128xf32>
      %14 = vector.broadcast %13 : vector<1x128xf32> to vector<16x128xf32>
      %15 = arith.addf %12, %14 : vector<16x128xf32>
      %cst_12 = arith.constant 0.000000e+00 : f32
      %16 = vector.broadcast %cst_12 : f32 to vector<16x128xf32>
      %17 = arith.maximumf %15, %16 : vector<16x128xf32>
      %18 = arith.truncf %17 : vector<16x128xf32> to vector<16x128xbf16>
      %c0_13 = arith.constant 0 : index
      %c0_14 = arith.constant 0 : index
      %19 = vector.load %arg5[%c0_13, %c0_14] : memref<128x128xbf16, #tpu.memory_space<vmem>>, vector<128x128xbf16>
      %cst_15 = arith.constant dense<0.000000e+00> : vector<16x128xf32>
      %20 = tpu.matmul %18, %19, %cst_15 {dimension_numbers = #tpu.dot_dimension_numbers<[1], [0], [0], [1], [0, 0, 1, 1], [], []>} : vector<16x128xbf16>, vector<128x128xbf16>, vector<16x128xf32> -> vector<16x128xf32>
      %c0_16 = arith.constant 0 : index
      %c0_17 = arith.constant 0 : index
      %21 = vector.load %arg6[%c0_16, %c0_17] : memref<1x128xf32, #tpu.memory_space<vmem>>, vector<1x128xf32>
      %22 = vector.broadcast %21 : vector<1x128xf32> to vector<16x128xf32>
      %23 = arith.addf %20, %22 : vector<16x128xf32>
      %cst_18 = arith.constant 0.000000e+00 : f32
      %24 = vector.broadcast %cst_18 : f32 to vector<16x128xf32>
      %25 = arith.maximumf %23, %24 : vector<16x128xf32>
      %26 = arith.truncf %25 : vector<16x128xf32> to vector<16x128xbf16>
      %c0_19 = arith.constant 0 : index
      %c0_20 = arith.constant 0 : index
      %27 = vector.load %arg7[%c0_19, %c0_20] : memref<128x128xbf16, #tpu.memory_space<vmem>>, vector<128x128xbf16>
      %cst_21 = arith.constant dense<0.000000e+00> : vector<16x128xf32>
      %28 = tpu.matmul %26, %27, %cst_21 {dimension_numbers = #tpu.dot_dimension_numbers<[1], [0], [0], [1], [0, 0, 1, 1], [], []>} : vector<16x128xbf16>, vector<128x128xbf16>, vector<16x128xf32> -> vector<16x128xf32>
      %c0_22 = arith.constant 0 : index
      %c0_23 = arith.constant 0 : index
      %29 = vector.load %arg8[%c0_22, %c0_23] : memref<1x128xf32, #tpu.memory_space<vmem>>, vector<1x128xf32>
      %30 = vector.broadcast %29 : vector<1x128xf32> to vector<16x128xf32>
      %31 = arith.addf %28, %30 : vector<16x128xf32>
      %c0_24 = arith.constant 0 : index
      %c0_25 = arith.constant 0 : index
      %32 = vector.load %arg9[%c0_24, %c0_25] : memref<16x128xf32, #tpu.memory_space<vmem>>, vector<16x128xf32>
      tpu.vector_store %arg9[%c0_24, %c0_25], %31 {strides = array<i32>} : memref<16x128xf32, #tpu.memory_space<vmem>>, vector<16x128xf32>,
    } else {
    }
    return
  }
  func.func @transform_0(%arg0: i32, %arg1: i32) -> (i32, i32) {
    %c0_i32 = arith.constant 0 : i32
    return %arg0, %arg1 : i32, i32
  }
  func.func @transform_1(%arg0: i32, %arg1: i32) -> (i32, i32) {
    %c0_i32 = arith.constant 0 : i32
    %c0_i32_0 = arith.constant 0 : i32
    return %arg1, %c0_i32 : i32, i32
  }
  func.func @transform_2(%arg0: i32, %arg1: i32) -> (i32, i32) {
    %c0_i32 = arith.constant 0 : i32
    %c0_i32_0 = arith.constant 0 : i32
    %c0_i32_1 = arith.constant 0 : i32
    return %c0_i32, %c0_i32_0 : i32, i32
  }
  func.func @transform_3(%arg0: i32, %arg1: i32) -> (i32, i32) {
    %c0_i32 = arith.constant 0 : i32
    %c0_i32_0 = arith.constant 0 : i32
    %c0_i32_1 = arith.constant 0 : i32
    return %c0_i32, %c0_i32_0 : i32, i32
  }
  func.func @transform_4(%arg0: i32, %arg1: i32) -> (i32, i32) {
    %c0_i32 = arith.constant 0 : i32
    %c0_i32_0 = arith.constant 0 : i32
    %c0_i32_1 = arith.constant 0 : i32
    return %c0_i32, %c0_i32_0 : i32, i32
  }
  func.func @transform_5(%arg0: i32, %arg1: i32) -> (i32, i32) {
    %c0_i32 = arith.constant 0 : i32
    %c0_i32_0 = arith.constant 0 : i32
    %c0_i32_1 = arith.constant 0 : i32
    return %c0_i32, %c0_i32_0 : i32, i32
  }
  func.func @transform_6(%arg0: i32, %arg1: i32) -> (i32, i32) {
    %c0_i32 = arith.constant 0 : i32
    %c0_i32_0 = arith.constant 0 : i32
    %c0_i32_1 = arith.constant 0 : i32
    return %c0_i32, %c0_i32_0 : i32, i32
  }
  func.func @transform_7(%arg0: i32, %arg1: i32) -> (i32, i32) {
    %c0_i32 = arith.constant 0 : i32
    %c0_i32_0 = arith.constant 0 : i32
    return %arg0, %c0_i32 : i32, i32
  }
}

</mosaic_0001>

<llo_original>
// kernel: _lambda_.1
$region0: #{_lambda_.1}
  #allocation0 [shape = 'u32[]', space=smem, size = 0x4, offset = 0x4, fixed_abs, tag = 'smem constant byte address 0x4 - core index']
  #allocation1 [shape = 'u32[144,128]{1,0:T(1,128)}', space=vmem, size = 0x12000, scoped, tag = 'internal scratch']
  #allocation2 [shape = 'f32[16,128]{1,0:T(8,128)}', space=vmem, size = 0x2000, scoped, tag = 'scratch operand']
  %s0 = inlined_call_operand.vmem [shape: bf16[16,256], index: 0, kind: input, shape index: {}]
  %s1 = inlined_call_operand.vmem [shape: bf16[256,128], index: 1, kind: input, shape index: {}]
  %s2 = inlined_call_operand.vmem [shape: f32[1,128], index: 2, kind: input, shape index: {}]
  %s3 = inlined_call_operand.vmem [shape: bf16[128,128], index: 3, kind: input, shape index: {}]
  %s4 = inlined_call_operand.vmem [shape: f32[1,128], index: 4, kind: input, shape index: {}]
  %s5 = inlined_call_operand.vmem [shape: bf16[128,128], index: 5, kind: input, shape index: {}]
  %s6 = inlined_call_operand.vmem [shape: f32[1,128], index: 6, kind: input, shape index: {}]
  %s7 = inlined_call_operand.vmem [shape: f32[16,128], index: 7, kind: output, shape index: {}]
  %s8 = sld [smem:[#allocation0]]
  $region50: #{_lambda_.1} parent=0
    _
  %s10 = ssub.s32 1, %s8
  %s11 = scalar_select 0, %s10, %s8
  // Predicated region
  $region2: #{_lambda_.1} parent=0 // pred_check
    _
  $region3: #{_lambda_.1} parent=0 // pred_check_branch
    %13 = sbr.rel (0) target = $region5
  $region4: #{_lambda_.1} parent=0 // pred_region
    _
  $region5: #{_lambda_.1} parent=0 // pred_fallthru
    _
  // Predicated region
  $region6: #{_lambda_.1} parent=0 // pred_check
    _
  $region7: #{_lambda_.1} parent=0 // pred_check_branch
    %15 = sbr.rel (0) target = $region9
  $region8: #{_lambda_.1} parent=0 // pred_region
    _
  $region9: #{_lambda_.1} parent=0 // pred_fallthru
    _
  // Predicated region
  $region10: #{_lambda_.1} parent=0 // pred_check
    _
  $region11: #{_lambda_.1} parent=0 // pred_check_branch
    %17 = sbr.rel (0) target = $region13
  $region12: #{_lambda_.1} parent=0 // pred_region
    _
  $region13: #{_lambda_.1} parent=0 // pred_fallthru
    _
  // Predicated region
  $region14: #{_lambda_.1} parent=0 // pred_check
    _
  $region15: #{_lambda_.1} parent=0 // pred_check_branch
    %19 = sbr.rel (0) target = $region17
  $region16: #{_lambda_.1} parent=0 // pred_region
    _
  $region17: #{_lambda_.1} parent=0 // pred_fallthru
    _
  // Predicated region
  $region18: #{_lambda_.1} parent=0 // pred_check
    _
  $region19: #{_lambda_.1} parent=0 // pred_check_branch
    %21 = sbr.rel (0) target = $region21
  $region20: #{_lambda_.1} parent=0 // pred_region
    _
  $region21: #{_lambda_.1} parent=0 // pred_fallthru
    _
  // Predicated region
  $region22: #{_lambda_.1} parent=0 // pred_check
    _
  $region23: #{_lambda_.1} parent=0 // pred_check_branch
    %23 = sbr.rel (0) target = $region25
  $region24: #{_lambda_.1} parent=0 // pred_region
    _
  $region25: #{_lambda_.1} parent=0 // pred_fallthru
    _
  // Predicated region
  $region26: #{_lambda_.1} parent=0 // pred_check
    _
  $region27: #{_lambda_.1} parent=0 // pred_check_branch
    %25 = sbr.rel (0) target = $region29
  $region28: #{_lambda_.1} parent=0 // pred_region
    _
  $region29: #{_lambda_.1} parent=0 // pred_fallthru
    _
  %v27 = vld [vmem:[%s0] sm:$0xff]
  %v28 = vld [vmem:[%s0 + $0x8] sm:$0xff]
  %v29 = vld [vmem:[%s1] sm:$0xf]
  %v30 = vld [vmem:[%s1 + $0x4] sm:$0xf]
  %v31 = vld [vmem:[%s1 + $0x8] sm:$0xf]
  %v32 = vld [vmem:[%s1 + $0xc] sm:$0xf]
  %v33 = vld [vmem:[%s1 + $0x10] sm:$0xf]
  %v34 = vld [vmem:[%s1 + $0x14] sm:$0xf]
  %v35 = vld [vmem:[%s1 + $0x18] sm:$0xf]
  %v36 = vld [vmem:[%s1 + $0x1c] sm:$0xf]
  %v37 = vld [vmem:[%s1 + $0x20] sm:$0xf]
  %v38 = vld [vmem:[%s1 + $0x24] sm:$0xf]
  %v39 = vld [vmem:[%s1 + $0x28] sm:$0xf]
  %v40 = vld [vmem:[%s1 + $0x2c] sm:$0xf]
  %v41 = vld [vmem:[%s1 + $0x30] sm:$0xf]
  %v42 = vld [vmem:[%s1 + $0x34] sm:$0xf]
  %v43 = vld [vmem:[%s1 + $0x38] sm:$0xf]
  %v44 = vld [vmem:[%s1 + $0x3c] sm:$0xf]
  %v45 = vld [vmem:[%s1 + $0x40] sm:$0xf]
  %v46 = vld [vmem:[%s1 + $0x44] sm:$0xf]
  %v47 = vld [vmem:[%s1 + $0x48] sm:$0xf]
  %v48 = vld [vmem:[%s1 + $0x4c] sm:$0xf]
  %v49 = vld [vmem:[%s1 + $0x50] sm:$0xf]
  %v50 = vld [vmem:[%s1 + $0x54] sm:$0xf]
  %v51 = vld [vmem:[%s1 + $0x58] sm:$0xf]
  %v52 = vld [vmem:[%s1 + $0x5c] sm:$0xf]
  %v53 = vld [vmem:[%s1 + $0x60] sm:$0xf]
  %v54 = vld [vmem:[%s1 + $0x64] sm:$0xf]
  %v55 = vld [vmem:[%s1 + $0x68] sm:$0xf]
  %v56 = vld [vmem:[%s1 + $0x6c] sm:$0xf]
  %v57 = vld [vmem:[%s1 + $0x70] sm:$0xf]
  %v58 = vld [vmem:[%s1 + $0x74] sm:$0xf]
  %v59 = vld [vmem:[%s1 + $0x78] sm:$0xf]
  %v60 = vld [vmem:[%s1 + $0x7c] sm:$0xf]
  %v63 = vunpack.c.l.b16 %v27
  %v64 = vunpack.c.h.b16 %v27
  %v65 = vunpack.c.l.b16 %v28
  %v66 = vunpack.c.h.b16 %v28
  %v67 = vpack.c.b16 %v65, %v63
  %v68 = vpack.c.b16 %v66, %v64
  %v103 = vunpack.c.l.b16 %v29
  %v104 = vunpack.c.l.b16 %v30
  %v105 = vunpack.c.l.b16 %v31
  %v106 = vunpack.c.l.b16 %v32
  %v107 = vunpack.c.l.b16 %v33
  %v108 = vunpack.c.l.b16 %v34
  %v109 = vunpack.c.l.b16 %v35
  %v110 = vunpack.c.l.b16 %v36
  %v111 = vunpack.c.l.b16 %v37
  %v112 = vunpack.c.l.b16 %v38
  %v113 = vunpack.c.l.b16 %v39
  %v114 = vunpack.c.l.b16 %v40
  %v115 = vunpack.c.l.b16 %v41
  %v116 = vunpack.c.l.b16 %v42
  %v117 = vunpack.c.l.b16 %v43
  %v118 = vunpack.c.l.b16 %v44
  %v119 = vunpack.c.l.b16 %v45
  %v120 = vunpack.c.l.b16 %v46
  %v121 = vunpack.c.l.b16 %v47
  %v122 = vunpack.c.l.b16 %v48
  %v123 = vunpack.c.l.b16 %v49
  %v124 = vunpack.c.l.b16 %v50
  %v125 = vunpack.c.l.b16 %v51
  %v126 = vunpack.c.l.b16 %v52
  %v127 = vunpack.c.l.b16 %v53
  %v128 = vunpack.c.l.b16 %v54
  %v129 = vunpack.c.l.b16 %v55
  %v130 = vunpack.c.l.b16 %v56
  %v131 = vunpack.c.l.b16 %v57
  %v132 = vunpack.c.l.b16 %v58
  %v133 = vunpack.c.l.b16 %v59
  %v134 = vunpack.c.l.b16 %v60
  %v135 = vpack.c.b16 %v104, %v103
  %v136 = vpack.c.b16 %v106, %v105
  %v137 = vpack.c.b16 %v108, %v107
  %v138 = vpack.c.b16 %v110, %v109
  %v139 = vpack.c.b16 %v112, %v111
  %v140 = vpack.c.b16 %v114, %v113
  %v141 = vpack.c.b16 %v116, %v115
  %v142 = vpack.c.b16 %v118, %v117
  %v143 = vpack.c.b16 %v120, %v119
  %v144 = vpack.c.b16 %v122, %v121
  %v145 = vpack.c.b16 %v124, %v123
  %v146 = vpack.c.b16 %v126, %v125
  %v147 = vpack.c.b16 %v128, %v127
  %v148 = vpack.c.b16 %v130, %v129
  %v149 = vpack.c.b16 %v132, %v131
  %v150 = vpack.c.b16 %v134, %v133
  %167 = vmatprep.subr.bf16.mxu0 0
  %168 = vmatpush1.bf16.msra.mxu0 %v135
  %169 = vmatprep.subr.bf16.mxu0 0
  %170 = vmatpush1.bf16.msra.mxu0 %v136
  %171 = vmatprep.subr.bf16.mxu0 0
  %172 = vmatpush1.bf16.msra.mxu0 %v137
  %173 = vmatprep.subr.bf16.mxu0 0
  %174 = vmatpush1.bf16.msra.mxu0 %v138
  %175 = vmatprep.subr.bf16.mxu0 0
  %176 = vmatpush1.bf16.msra.mxu0 %v139
  %177 = vmatprep.subr.bf16.mxu0 0
  %178 = vmatpush1.bf16.msra.mxu0 %v140
  %179 = vmatprep.subr.bf16.mxu0 0
  %180 = vmatpush1.bf16.msra.mxu0 %v141
  %181 = vmatprep.subr.bf16.mxu0 0
  %182 = vmatpush1.bf16.msra.mxu0 %v142
  %183 = vmatprep.subr.bf16.mxu0 0
  %184 = vmatpush1.bf16.msra.mxu0 %v143
  %185 = vmatprep.subr.bf16.mxu0 0
  %186 = vmatpush1.bf16.msra.mxu0 %v144
  %187 = vmatprep.subr.bf16.mxu0 0
  %188 = vmatpush1.bf16.msra.mxu0 %v145
  %189 = vmatprep.subr.bf16.mxu0 0
  %190 = vmatpush1.bf16.msra.mxu0 %v146
  %191 = vmatprep.subr.bf16.mxu0 0
  %192 = vmatpush1.bf16.msra.mxu0 %v147
  %193 = vmatprep.subr.bf16.mxu0 0
  %194 = vmatpush1.bf16.msra.mxu0 %v148
  %195 = vmatprep.subr.bf16.mxu0 0
  %196 = vmatpush1.bf16.msra.mxu0 %v149
  %197 = vmatprep.subr.bf16.mxu0 0
  %198 = vmatpush1.bf16.msra.mxu0 %v150
  %199 = vmatprep.mubr.bf16.mxu0 %v68
  %200 = vmatmul.mubr.bf16.gmra.mrb[0].mxu0 %v67
  %v201 = vpop.f32.mrb[0].mxu0
  %v202 = vadd.f32 0.0, %v201
  %v203 = vpop.f32.mrb[0].mxu0
  %v204 = vpop.f32.mrb[0].mxu0
  %v205 = vadd.f32 0.0, %v204
  %v206 = vpop.f32.mrb[0].mxu0
  %207 = vdwg.mxu0
  %p208 = scmp.eq.s32.totalorder 0, 0
  // Predicated region
  $region30: #{_lambda_.1} parent=0 // pred_check
    %p209 = pneg %p208
  $region31: #{_lambda_.1} parent=0 // pred_check_branch
    %211 = sbr.rel (%p209) target = $region33
  $region32: #{_lambda_.1} parent=0 // pred_region
    %212 = vst [vmem:[#allocation2] sm:$0xff] %v202
    %213 = vst [vmem:[#allocation2 + $0x8] sm:$0xff] %v205
  $region33: #{_lambda_.1} parent=0 // pred_fallthru
    _
  %p214 = scmp.gt.s32.totalorder 0, 0
  // Predicated region
  $region34: #{_lambda_.1} parent=0 // pred_check
    %p215 = pneg %p214
  $region35: #{_lambda_.1} parent=0 // pred_check_branch
    %217 = sbr.rel (%p215) target = $region37
  $region36: #{_lambda_.1} parent=0 // pred_region
    %v218 = vld [vmem:[#allocation2] sm:$0xff]
    %v219 = vld [vmem:[#allocation2 + $0x8] sm:$0xff]
    %v220 = vadd.f32 %v218, %v202
    %v221 = vadd.f32 %v219, %v205
    %222 = vst [vmem:[#allocation2] sm:$0xff] %v220
    %223 = vst [vmem:[#allocation2 + $0x8] sm:$0xff] %v221
  $region37: #{_lambda_.1} parent=0 // pred_fallthru
    _
  // Predicated region
  $region38: #{_lambda_.1} parent=0 // pred_check
    %p224 = pneg %p208
  $region39: #{_lambda_.1} parent=0 // pred_check_branch
    %226 = sbr.rel (%p224) target = $region41
  $region40: #{_lambda_.1} parent=0 // pred_region
    %v227 = vld [vmem:[#allocation2] sm:$0xff]
    %v228 = vld [vmem:[#allocation2 + $0x8] sm:$0xff]
    %v229 = vld [vmem:[%s2] sm:$0x1]
    %v231 = vlaneseq
    %v232 = vshrl.u32 %v231, 7
    %v233 = vsub.s32 0, %v232
    %v234 = vrot.slane %v229, %v233
    %v236 = vadd.f32 %v227, %v234
    %v237 = vadd.f32 %v228, %v234
    %v238 = vmax.f32 %v236, 0.0
    %v239 = vmax.f32 %v237, 0.0
    %v240 = vpack.c.bf16 %v239, %v238
    %v241 = vld [vmem:[%s3] sm:$0xf]
    %v242 = vld [vmem:[%s3 + $0x4] sm:$0xf]
    %v243 = vld [vmem:[%s3 + $0x8] sm:$0xf]
    %v244 = vld [vmem:[%s3 + $0xc] sm:$0xf]
    %v245 = vld [vmem:[%s3 + $0x10] sm:$0xf]
    %v246 = vld [vmem:[%s3 + $0x14] sm:$0xf]
    %v247 = vld [vmem:[%s3 + $0x18] sm:$0xf]
    %v248 = vld [vmem:[%s3 + $0x1c] sm:$0xf]
    %v249 = vld [vmem:[%s3 + $0x20] sm:$0xf]
    %v250 = vld [vmem:[%s3 + $0x24] sm:$0xf]
    %v251 = vld [vmem:[%s3 + $0x28] sm:$0xf]
    %v252 = vld [vmem:[%s3 + $0x2c] sm:$0xf]
    %v253 = vld [vmem:[%s3 + $0x30] sm:$0xf]
    %v254 = vld [vmem:[%s3 + $0x34] sm:$0xf]
    %v255 = vld [vmem:[%s3 + $0x38] sm:$0xf]
    %v256 = vld [vmem:[%s3 + $0x3c] sm:$0xf]
    %v257 = vld [vmem:[%s4] sm:$0x1]
    %v259 = vlaneseq
    %v260 = vshrl.u32 %v259, 7
    %v261 = vsub.s32 0, %v260
    %v262 = vrot.slane %v257, %v261
    %v280 = vunpack.c.l.b16 %v241
    %v281 = vunpack.c.l.b16 %v242
    %v282 = vunpack.c.l.b16 %v243
    %v283 = vunpack.c.l.b16 %v244
    %v284 = vunpack.c.l.b16 %v245
    %v285 = vunpack.c.l.b16 %v246
    %v286 = vunpack.c.l.b16 %v247
    %v287 = vunpack.c.l.b16 %v248
    %v288 = vunpack.c.l.b16 %v249
    %v289 = vunpack.c.l.b16 %v250
    %v290 = vunpack.c.l.b16 %v251
    %v291 = vunpack.c.l.b16 %v252
    %v292 = vunpack.c.l.b16 %v253
    %v293 = vunpack.c.l.b16 %v254
    %v294 = vunpack.c.l.b16 %v255
    %v295 = vunpack.c.l.b16 %v256
    %v296 = vpack.c.b16 %v281, %v280
    %v297 = vpack.c.b16 %v283, %v282
    %v298 = vpack.c.b16 %v285, %v284
    %v299 = vpack.c.b16 %v287, %v286
    %v300 = vpack.c.b16 %v289, %v288
    %v301 = vpack.c.b16 %v291, %v290
    %v302 = vpack.c.b16 %v293, %v292
    %v303 = vpack.c.b16 %v295, %v294
    %312 = vmatprep.subr.bf16.mxu0 0
    %313 = vmatpush1.bf16.msra.mxu0 %v296
    %314 = vmatprep.subr.bf16.mxu0 0
    %315 = vmatpush1.bf16.msra.mxu0 %v297
    %316 = vmatprep.subr.bf16.mxu0 0
    %317 = vmatpush1.bf16.msra.mxu0 %v298
    %318 = vmatprep.subr.bf16.mxu0 0
    %319 = vmatpush1.bf16.msra.mxu0 %v299
    %320 = vmatprep.subr.bf16.mxu0 0
    %321 = vmatpush1.bf16.msra.mxu0 %v300
    %322 = vmatprep.subr.bf16.mxu0 0
    %323 = vmatpush1.bf16.msra.mxu0 %v301
    %324 = vmatprep.subr.bf16.mxu0 0
    %325 = vmatpush1.bf16.msra.mxu0 %v302
    %326 = vmatprep.subr.bf16.mxu0 0
    %327 = vmatpush1.bf16.msra.mxu0 %v303
    %328 = vmatprep.subr.bf16.mxu0 0
    %329 = vmatpush1.bf16.msra.mxu0 0
    %330 = vmatprep.subr.bf16.mxu0 0
    %331 = vmatpush1.bf16.msra.mxu0 0
    %332 = vmatprep.subr.bf16.mxu0 0
    %333 = vmatpush1.bf16.msra.mxu0 0
    %334 = vmatprep.subr.bf16.mxu0 0
    %335 = vmatpush1.bf16.msra.mxu0 0
    %336 = vmatprep.subr.bf16.mxu0 0
    %337 = vmatpush1.bf16.msra.mxu0 0
    %338 = vmatprep.subr.bf16.mxu0 0
    %339 = vmatpush1.bf16.msra.mxu0 0
    %340 = vmatprep.subr.bf16.mxu0 0
    %341 = vmatpush1.bf16.msra.mxu0 0
    %342 = vmatprep.subr.bf16.mxu0 0
    %343 = vmatpush1.bf16.msra.mxu0 0
    %344 = vmatprep.mubr.bf16.mxu0 0
    %345 = vmatmul.mubr.bf16.gmra.mrb[0].mxu0 %v240
    %v346 = vpop.f32.mrb[0].mxu0
    %v347 = vadd.f32 %v262, %v346
    %v348 = vpop.f32.mrb[0].mxu0
    %v349 = vpop.f32.mrb[0].mxu0
    %v350 = vadd.f32 %v262, %v349
    %v351 = vpop.f32.mrb[0].mxu0
    %352 = vdwg.mxu0
    %v353 = vmax.f32 %v347, 0.0
    %v354 = vmax.f32 %v350, 0.0
    %v355 = vpack.c.bf16 %v354, %v353
    %v356 = vld [vmem:[%s5] sm:$0xf]
    %v357 = vld [vmem:[%s5 + $0x4] sm:$0xf]
    %v358 = vld [vmem:[%s5 + $0x8] sm:$0xf]
    %v359 = vld [vmem:[%s5 + $0xc] sm:$0xf]
    %v360 = vld [vmem:[%s5 + $0x10] sm:$0xf]
    %v361 = vld [vmem:[%s5 + $0x14] sm:$0xf]
    %v362 = vld [vmem:[%s5 + $0x18] sm:$0xf]
    %v363 = vld [vmem:[%s5 + $0x1c] sm:$0xf]
    %v364 = vld [vmem:[%s5 + $0x20] sm:$0xf]
    %v365 = vld [vmem:[%s5 + $0x24] sm:$0xf]
    %v366 = vld [vmem:[%s5 + $0x28] sm:$0xf]
    %v367 = vld [vmem:[%s5 + $0x2c] sm:$0xf]
    %v368 = vld [vmem:[%s5 + $0x30] sm:$0xf]
    %v369 = vld [vmem:[%s5 + $0x34] sm:$0xf]
    %v370 = vld [vmem:[%s5 + $0x38] sm:$0xf]
    %v371 = vld [vmem:[%s5 + $0x3c] sm:$0xf]
    %v372 = vld [vmem:[%s6] sm:$0x1]
    %v374 = vlaneseq
    %v375 = vshrl.u32 %v374, 7
    %v376 = vsub.s32 0, %v375
    %v377 = vrot.slane %v372, %v376
    %v395 = vunpack.c.l.b16 %v356
    %v396 = vunpack.c.l.b16 %v357
    %v397 = vunpack.c.l.b16 %v358
    %v398 = vunpack.c.l.b16 %v359
    %v399 = vunpack.c.l.b16 %v360
    %v400 = vunpack.c.l.b16 %v361
    %v401 = vunpack.c.l.b16 %v362
    %v402 = vunpack.c.l.b16 %v363
    %v403 = vunpack.c.l.b16 %v364
    %v404 = vunpack.c.l.b16 %v365
    %v405 = vunpack.c.l.b16 %v366
    %v406 = vunpack.c.l.b16 %v367
    %v407 = vunpack.c.l.b16 %v368
    %v408 = vunpack.c.l.b16 %v369
    %v409 = vunpack.c.l.b16 %v370
    %v410 = vunpack.c.l.b16 %v371
    %v411 = vpack.c.b16 %v396, %v395
    %v412 = vpack.c.b16 %v398, %v397
    %v413 = vpack.c.b16 %v400, %v399
    %v414 = vpack.c.b16 %v402, %v401
    %v415 = vpack.c.b16 %v404, %v403
    %v416 = vpack.c.b16 %v406, %v405
    %v417 = vpack.c.b16 %v408, %v407
    %v418 = vpack.c.b16 %v410, %v409
    %427 = vmatprep.subr.bf16.mxu0 0
    %428 = vmatpush1.bf16.msra.mxu0 %v411
    %429 = vmatprep.subr.bf16.mxu0 0
    %430 = vmatpush1.bf16.msra.mxu0 %v412
    %431 = vmatprep.subr.bf16.mxu0 0
    %432 = vmatpush1.bf16.msra.mxu0 %v413
    %433 = vmatprep.subr.bf16.mxu0 0
    %434 = vmatpush1.bf16.msra.mxu0 %v414
    %435 = vmatprep.subr.bf16.mxu0 0
    %436 = vmatpush1.bf16.msra.mxu0 %v415
    %437 = vmatprep.subr.bf16.mxu0 0
    %438 = vmatpush1.bf16.msra.mxu0 %v416
    %439 = vmatprep.subr.bf16.mxu0 0
    %440 = vmatpush1.bf16.msra.mxu0 %v417
    %441 = vmatprep.subr.bf16.mxu0 0
    %442 = vmatpush1.bf16.msra.mxu0 %v418
    %443 = vmatprep.subr.bf16.mxu0 0
    %444 = vmatpush1.bf16.msra.mxu0 0
    %445 = vmatprep.subr.bf16.mxu0 0
    %446 = vmatpush1.bf16.msra.mxu0 0
    %447 = vmatprep.subr.bf16.mxu0 0
    %448 = vmatpush1.bf16.msra.mxu0 0
    %449 = vmatprep.subr.bf16.mxu0 0
    %450 = vmatpush1.bf16.msra.mxu0 0
    %451 = vmatprep.subr.bf16.mxu0 0
    %452 = vmatpush1.bf16.msra.mxu0 0
    %453 = vmatprep.subr.bf16.mxu0 0
    %454 = vmatpush1.bf16.msra.mxu0 0
    %455 = vmatprep.subr.bf16.mxu0 0
    %456 = vmatpush1.bf16.msra.mxu0 0
    %457 = vmatprep.subr.bf16.mxu0 0
    %458 = vmatpush1.bf16.msra.mxu0 0
    %459 = vmatprep.mubr.bf16.mxu0 0
    %460 = vmatmul.mubr.bf16.gmra.mrb[0].mxu0 %v355
    %v461 = vpop.f32.mrb[0].mxu0
    %v462 = vadd.f32 %v377, %v461
    %v463 = vpop.f32.mrb[0].mxu0
    %v464 = vpop.f32.mrb[0].mxu0
    %v465 = vadd.f32 %v377, %v464
    %v466 = vpop.f32.mrb[0].mxu0
    %467 = vdwg.mxu0
    %468 = vst [vmem:[%s7] sm:$0xff] %v462
    %469 = vst [vmem:[%s7 + $0x8] sm:$0xff] %v465
  $region41: #{_lambda_.1} parent=0 // pred_fallthru
    _
  // Predicated region
  $region42: #{_lambda_.1} parent=0 // pred_check
    _
  $region43: #{_lambda_.1} parent=0 // pred_check_branch
    %471 = sbr.rel (0) target = $region45
  $region44: #{_lambda_.1} parent=0 // pred_region
    _
  $region45: #{_lambda_.1} parent=0 // pred_fallthru
    _
  // Predicated region
  $region46: #{_lambda_.1} parent=0 // pred_check
    _
  $region47: #{_lambda_.1} parent=0 // pred_check_branch
    %473 = sbr.rel (0) target = $region49
  $region48: #{_lambda_.1} parent=0 // pred_region
    _
  $region49: #{_lambda_.1} parent=0 // pred_fallthru
    _

</llo_original>
